<compile_context>
chip_gen: v7x
topology: tpu7x:2x2x1
jax: 0.10.0
libtpu: 0.0.40
codegen_flags: <defaults>
</compile_context>

<pallas_src>
import jax
import jax.numpy as jnp
from jax.experimental import pallas as pl
from jax.experimental.pallas import tpu as pltpu

LANE = 128
SUBLANE = 8


def _round_up(n, m):
    return ((n + m - 1) // m) * m


# ----------------------------------------------------------------------------
# Fused kernel: im2col-conv + ReLU + GAP + fc + all heads + segmented softmax
# ----------------------------------------------------------------------------
def make_fused_kernel(class_sizes, offsets):
    NEG = -1e30  # finite "minus infinity" for masked softmax lanes

    def kernel(p_ref, pool_ref, wc_ref, bc_ref, wf_ref, bf_ref,
               wh_ref, bh_ref, o_ref):
        # p_ref   : (B*HW, K_pad)      bf16  im2col patches (batch folded into rows)
        # pool_ref: (B_pad, B*HW)      f32   block-diagonal 1/HW pooling matrix
        # wc_ref  : (K_pad, COUT_pad)  bf16  conv weight (im2col layout, lane-padded)
        # bc_ref  : (1, COUT_pad)      f32
        # wf_ref  : (COUT_pad, F_pad)  bf16  backbone fc weight
        # bf_ref  : (1, F_pad)         f32
        # wh_ref  : (F_pad, CT_pad)    bf16  all head weights concatenated on lanes
        # bh_ref  : (1, CT_pad)        f32
        # o_ref   : (B_pad, CT_pad)    f32   concatenated per-head softmax probs

        # conv3x3 as one lane-dense matmul over all batch rows (MXU, bf16 -> f32 acc)
        conv = jnp.dot(p_ref[...], wc_ref[...],
                       preferred_element_type=jnp.float32)
        conv = jnp.maximum(conv + bc_ref[...], 0.0)                   # ReLU (f32)

        # global average pool per batch element: block-diagonal pooling matmul
        # (kept in f32 for accuracy; shape is tiny so MXU f32 passes are cheap)
        gap = jnp.dot(pool_ref[...], conv,
                      preferred_element_type=jnp.float32)             # (B_pad, COUT_pad)

        # backbone fc -> features
        feat = jnp.dot(gap.astype(jnp.bfloat16), wf_ref[...],
                       preferred_element_type=jnp.float32) + bf_ref[...]

        # all attribute heads in a single lane-dense matmul
        logits = jnp.dot(feat.astype(jnp.bfloat16), wh_ref[...],
                         preferred_element_type=jnp.float32) + bh_ref[...]

        # segmented (per-head), numerically-stable softmax; padded lanes -> 0
        B_pad, CT = logits.shape
        lane = jax.lax.broadcasted_iota(jnp.int32, (B_pad, CT), 1)
        probs = jnp.zeros_like(logits)
        for off, cs in zip(offsets, class_sizes):   # static, unrolled (few heads)
            mask = (lane >= off) & (lane < off + cs)
            lg = jnp.where(mask, logits, NEG)
            m = jnp.max(lg, axis=-1, keepdims=True)
            e = jnp.where(mask, jnp.exp(lg - m), 0.0)
            denom = jnp.sum(e, axis=-1, keepdims=True)
            probs = probs + e / denom               # exact normalization (F.softmax)
        o_ref[...] = probs

    return kernel


# ----------------------------------------------------------------------------
# JAX glue
# ----------------------------------------------------------------------------
def im2col_3x3(x):
    """x: [B, C, H, W] NCHW -> patches [B*H*W, C*9] (3x3, pad=1, stride=1).

    Channel-major / kernel-tap-minor feature ordering: a real PyTorch conv
    weight [COUT, C, 3, 3] must be reshaped to (C*9, COUT) with the same
    (C, 9) ordering, or results will be silently wrong.
    """
    B, C, H, W = x.shape
    xp = jnp.pad(x, ((0, 0), (0, 0), (1, 1), (1, 1)))
    taps = []
    for dy in range(3):
        for dx in range(3):
            taps.append(xp[:, :, dy:dy + H, dx:dx + W])   # [B, C, H, W]
    p = jnp.stack(taps, axis=2)                            # [B, C, 9, H, W]
    p = p.transpose(0, 3, 4, 1, 2)                         # [B, H, W, C, 9]
    return p.reshape(B * H * W, C * 9)


def pack_params(params, attributes):
    """Pad / concatenate logical params into lane-dense (x128) bf16/f32 slabs."""
    wc, bc, wf, bf = params["wc"], params["bc"], params["wf"], params["bf"]
    K, COUT = wc.shape
    F = wf.shape[1]
    K_p = _round_up(K, LANE)
    COUT_p = _round_up(COUT, LANE)
    F_p = _round_up(F, LANE)

    wh = jnp.concatenate([params["heads"][a][0] for a in attributes], axis=1)
    bh = jnp.concatenate([params["heads"][a][1] for a in attributes], axis=1)
    CTOT = wh.shape[1]
    CT_p = _round_up(CTOT, LANE)

    return {
        "wc": jnp.pad(wc, ((0, K_p - K), (0, COUT_p - COUT))).astype(jnp.bfloat16),
        "bc": jnp.pad(bc, ((0, 0), (0, COUT_p - COUT))).astype(jnp.float32),
        "wf": jnp.pad(wf, ((0, COUT_p - COUT), (0, F_p - F))).astype(jnp.bfloat16),
        "bf": jnp.pad(bf, ((0, 0), (0, F_p - F))).astype(jnp.float32),
        "wh": jnp.pad(wh, ((0, F_p - F), (0, CT_p - CTOT))).astype(jnp.bfloat16),
        "bh": jnp.pad(bh, ((0, 0), (0, CT_p - CTOT))).astype(jnp.float32),
        "K_pad": K_p,
    }


def modified_cnn_v2_forward(x, packed, class_sizes, attributes):
    """Full ModifiedCNNv2 forward: {attribute: softmax probs [B, class_size]}."""
    B, C, H, W = x.shape
    HW = H * W
    offsets, o = [], 0
    for cs in class_sizes:
        offsets.append(o)
        o += cs

    # im2col in the wrapper (negligible at these shapes).
    # TODO(synk): for a real backbone, build patches inside the kernel to avoid
    # the 9x HBM duplication of the activation tensor.
    patches = im2col_3x3(x)                                           # (B*HW, C*9)
    K = patches.shape[1]
    K_p = packed["K_pad"]
    patches = jnp.pad(patches, ((0, 0), (0, K_p - K))).astype(jnp.bfloat16)

    # Pad the batch/row axis of the small downstream matmuls to 8 sublanes so
    # gap/feat/logits/output are dense (8,128) vregs; padded rows are discarded.
    B_pad = max(_round_up(B, SUBLANE), SUBLANE)

    # block-diagonal GAP pooling matrix: row b has 1/HW over its own HW rows.
    pool = jnp.repeat(jnp.eye(B, dtype=jnp.float32), HW, axis=1) * (1.0 / HW)
    pool = jnp.pad(pool, ((0, B_pad - B), (0, 0)))                    # (B_pad, B*HW)

    CT_p = packed["wh"].shape[1]
    kernel = make_fused_kernel(tuple(class_sizes), tuple(offsets))

    probs = pl.pallas_call(
        kernel,
        out_shape=jax.ShapeDtypeStruct((B_pad, CT_p), jnp.float32),
        in_specs=[
            pl.BlockSpec(patches.shape, lambda: (0, 0)),
            pl.BlockSpec(pool.shape, lambda: (0, 0)),
            pl.BlockSpec(packed["wc"].shape, lambda: (0, 0)),
            pl.BlockSpec(packed["bc"].shape, lambda: (0, 0)),
            pl.BlockSpec(packed["wf"].shape, lambda: (0, 0)),
            pl.BlockSpec(packed["bf"].shape, lambda: (0, 0)),
            pl.BlockSpec(packed["wh"].shape, lambda: (0, 0)),
            pl.BlockSpec(packed["bh"].shape, lambda: (0, 0)),
        ],
        out_specs=pl.BlockSpec((B_pad, CT_p), lambda: (0, 0)),
        compiler_params=pltpu.CompilerParams(vmem_limit_bytes=32 * 1024 * 1024),
    )(patches, pool, packed["wc"], packed["bc"], packed["wf"],
      packed["bf"], packed["wh"], packed["bh"])

    # per-attribute slices (lane-dense store done in-kernel; cheap slice here)
    return {attr: probs[:B, off:off + cs]
            for attr, off, cs in zip(attributes, offsets, class_sizes)}


# ----------------------------------------------------------------------------
# Pure-JAX reference (f32) for correctness checking
# ----------------------------------------------------------------------------
def reference_forward(x, params, class_sizes, attributes):
    B, C, H, W = x.shape
    patches = im2col_3x3(x)                                           # (B*HW, C*9)
    conv = jnp.maximum(patches @ params["wc"] + params["bc"], 0.0)
    gap = conv.reshape(B, H * W, -1).mean(axis=1)                     # (B, COUT)
    feat = gap @ params["wf"] + params["bf"]
    out = {}
    for attr in attributes:
        w, b = params["heads"][attr]
        out[attr] = jax.nn.softmax(feat @ w + b, axis=-1)
    return out


# ----------------------------------------------------------------------------
# Deterministic parameter init + demo
# ----------------------------------------------------------------------------
def init_params(key, C_in, C_conv, num_ftrs, class_sizes, attributes):
    keys = jax.random.split(key, 4 + 2 * len(attributes))
    params = {
        "wc": 0.1 * jax.random.normal(keys[0], (C_in * 9, C_conv), jnp.float32),
        "bc": 0.1 * jax.random.normal(keys[1], (1, C_conv), jnp.float32),
        "wf": 0.1 * jax.random.normal(keys[2], (C_conv, num_ftrs), jnp.float32),
        "bf": 0.1 * jax.random.normal(keys[3], (1, num_ftrs), jnp.float32),
        "heads": {},
    }
    for i, (attr, cs) in enumerate(zip(attributes, class_sizes)):
        kw = keys[4 + 2 * i]
        kb = keys[5 + 2 * i]
        params["heads"][attr] = (
            0.1 * jax.random.normal(kw, (num_ftrs, cs), jnp.float32),
            0.1 * jax.random.normal(kb, (1, cs), jnp.float32),
        )
    return params


if __name__ == "__main__":
    # Small shapes consistent with the module's forward.
    B, C_in, H, W = 2, 4, 16, 16
    C_conv = 8
    num_ftrs = 32                      # model_pretrained.fc.out_features
    class_sizes = [3, 5, 7]
    attributes = ["color", "shape", "size"]

    key = jax.random.PRNGKey(0)
    kx, kp = jax.random.split(key)
    x = jax.random.normal(kx, (B, C_in, H, W), jnp.float32)
    params = init_params(kp, C_in, C_conv, num_ftrs, class_sizes, attributes)
    packed = pack_params(params, attributes)

    out = modified_cnn_v2_forward(x, packed, class_sizes, attributes)
    out = jax.block_until_ready(out)
    ref = reference_forward(x, params, class_sizes, attributes)

    # Sanity: each head output is [B, class_size], non-negative, rows sum to 1,
    # and matches the f32 pure-JAX reference (bf16 matmuls -> loose tolerance).
    for attr, cs in zip(attributes, class_sizes):
        probs = out[attr]
        assert probs.shape == (B, cs), (attr, probs.shape)
        assert bool(jnp.all(probs >= 0.0)), attr
        assert jnp.allclose(jnp.sum(probs, axis=-1), 1.0, atol=1e-5), attr
        assert jnp.allclose(probs, ref[attr], atol=2e-2), (
            attr, jnp.max(jnp.abs(probs - ref[attr])))

    print("KERNEL_OK")
</pallas_src>

<mosaic_0001>
module attributes {stable_mosaic.version = 11 : i64} {
  func.func @kernel(%arg0: memref<512x128xbf16, #tpu.memory_space<vmem>>, %arg1: memref<8x512xf32, #tpu.memory_space<vmem>>, %arg2: memref<128x128xbf16, #tpu.memory_space<vmem>>, %arg3: memref<1x128xf32, #tpu.memory_space<vmem>>, %arg4: memref<128x128xbf16, #tpu.memory_space<vmem>>, %arg5: memref<1x128xf32, #tpu.memory_space<vmem>>, %arg6: memref<128x128xbf16, #tpu.memory_space<vmem>>, %arg7: memref<1x128xf32, #tpu.memory_space<vmem>>, %arg8: memref<8x128xf32, #tpu.memory_space<vmem>>) attributes {dimension_semantics = [], scalar_prefetch = 0 : i64, scratch_operands = 0 : i64, tpu.core_type = #tpu.core_type<tc>} {
    %c0 = arith.constant 0 : index
    %c0_0 = arith.constant 0 : index
    %0 = vector.load %arg0[%c0, %c0_0] : memref<512x128xbf16, #tpu.memory_space<vmem>>, vector<512x128xbf16>
    %c0_1 = arith.constant 0 : index
    %c0_2 = arith.constant 0 : index
    %1 = vector.load %arg2[%c0_1, %c0_2] : memref<128x128xbf16, #tpu.memory_space<vmem>>, vector<128x128xbf16>
    %cst = arith.constant dense<0.000000e+00> : vector<512x128xf32>
    %2 = tpu.matmul %0, %1, %cst {dimension_numbers = #tpu.dot_dimension_numbers<[1], [0], [0], [1], [0, 0, 1, 1], [], []>} : vector<512x128xbf16>, vector<128x128xbf16>, vector<512x128xf32> -> vector<512x128xf32>
    %c0_3 = arith.constant 0 : index
    %c0_4 = arith.constant 0 : index
    %3 = vector.load %arg3[%c0_3, %c0_4] : memref<1x128xf32, #tpu.memory_space<vmem>>, vector<1x128xf32>
    %4 = vector.broadcast %3 : vector<1x128xf32> to vector<512x128xf32>
    %5 = arith.addf %2, %4 : vector<512x128xf32>
    %cst_5 = arith.constant 0.000000e+00 : f32
    %6 = vector.broadcast %cst_5 : f32 to vector<512x128xf32>
    %7 = arith.maximumf %5, %6 : vector<512x128xf32>
    %c0_6 = arith.constant 0 : index
    %c0_7 = arith.constant 0 : index
    %8 = vector.load %arg1[%c0_6, %c0_7] : memref<8x512xf32, #tpu.memory_space<vmem>>, vector<8x512xf32>
    %cst_8 = arith.constant dense<0.000000e+00> : vector<8x128xf32>
    %9 = tpu.matmul %8, %7, %cst_8 {dimension_numbers = #tpu.dot_dimension_numbers<[1], [0], [0], [1], [0, 0, 1, 1], [], []>} : vector<8x512xf32>, vector<512x128xf32>, vector<8x128xf32> -> vector<8x128xf32>
    %10 = arith.truncf %9 : vector<8x128xf32> to vector<8x128xbf16>
    %c0_9 = arith.constant 0 : index
    %c0_10 = arith.constant 0 : index
    %11 = vector.load %arg4[%c0_9, %c0_10] : memref<128x128xbf16, #tpu.memory_space<vmem>>, vector<128x128xbf16>
    %cst_11 = arith.constant dense<0.000000e+00> : vector<8x128xf32>
    %12 = tpu.matmul %10, %11, %cst_11 {dimension_numbers = #tpu.dot_dimension_numbers<[1], [0], [0], [1], [0, 0, 1, 1], [], []>} : vector<8x128xbf16>, vector<128x128xbf16>, vector<8x128xf32> -> vector<8x128xf32>
    %c0_12 = arith.constant 0 : index
    %c0_13 = arith.constant 0 : index
    %13 = vector.load %arg5[%c0_12, %c0_13] : memref<1x128xf32, #tpu.memory_space<vmem>>, vector<1x128xf32>
    %14 = vector.broadcast %13 : vector<1x128xf32> to vector<8x128xf32>
    %15 = arith.addf %12, %14 : vector<8x128xf32>
    %16 = arith.truncf %15 : vector<8x128xf32> to vector<8x128xbf16>
    %c0_14 = arith.constant 0 : index
    %c0_15 = arith.constant 0 : index
    %17 = vector.load %arg6[%c0_14, %c0_15] : memref<128x128xbf16, #tpu.memory_space<vmem>>, vector<128x128xbf16>
    %cst_16 = arith.constant dense<0.000000e+00> : vector<8x128xf32>
    %18 = tpu.matmul %16, %17, %cst_16 {dimension_numbers = #tpu.dot_dimension_numbers<[1], [0], [0], [1], [0, 0, 1, 1], [], []>} : vector<8x128xbf16>, vector<128x128xbf16>, vector<8x128xf32> -> vector<8x128xf32>
    %c0_17 = arith.constant 0 : index
    %c0_18 = arith.constant 0 : index
    %19 = vector.load %arg7[%c0_17, %c0_18] : memref<1x128xf32, #tpu.memory_space<vmem>>, vector<1x128xf32>
    %20 = vector.broadcast %19 : vector<1x128xf32> to vector<8x128xf32>
    %21 = arith.addf %18, %20 : vector<8x128xf32>
    %22 = tpu.iota {dimensions = array<i32: 1>} : vector<8x128xi32>
    %cst_19 = arith.constant 0.000000e+00 : f32
    %23 = vector.broadcast %cst_19 : f32 to vector<8x128xf32>
    %c0_i32 = arith.constant 0 : i32
    %24 = vector.broadcast %c0_i32 : i32 to vector<8x128xi32>
    %25 = arith.cmpi sge, %22, %24 : vector<8x128xi32>
    %c3_i32 = arith.constant 3 : i32
    %26 = vector.broadcast %c3_i32 : i32 to vector<8x128xi32>
    %27 = arith.cmpi slt, %22, %26 : vector<8x128xi32>
    %28 = arith.andi %25, %27 : vector<8x128xi1>
    %cst_20 = arith.constant -1.000000e+30 : f32
    %29 = vector.broadcast %cst_20 : f32 to vector<8x128xf32>
    %30 = arith.select %28, %21, %29 : vector<8x128xi1>, vector<8x128xf32>
    %cst_21 = arith.constant dense<0xFF800000> : vector<8xf32>
    %31 = vector.multi_reduction <maximumf>, %30, %cst_21 [1] : vector<8x128xf32> to vector<8xf32>
    %32 = vector.shape_cast %31 : vector<8xf32> to vector<8x1xf32>
    %33 = vector.broadcast %32 : vector<8x1xf32> to vector<8x128xf32>
    %34 = arith.subf %30, %33 : vector<8x128xf32>
    %35 = math.exp %34 : vector<8x128xf32>
    %cst_22 = arith.constant 0.000000e+00 : f32
    %36 = vector.broadcast %cst_22 : f32 to vector<8x128xf32>
    %37 = arith.select %28, %35, %36 : vector<8x128xi1>, vector<8x128xf32>
    %cst_23 = arith.constant dense<0.000000e+00> : vector<8xf32>
    %38 = vector.multi_reduction <add>, %37, %cst_23 [1] : vector<8x128xf32> to vector<8xf32>
    %39 = vector.shape_cast %38 : vector<8xf32> to vector<8x1xf32>
    %40 = vector.broadcast %39 : vector<8x1xf32> to vector<8x128xf32>
    %41 = arith.divf %37, %40 : vector<8x128xf32>
    %42 = arith.addf %23, %41 : vector<8x128xf32>
    %c3_i32_24 = arith.constant 3 : i32
    %43 = vector.broadcast %c3_i32_24 : i32 to vector<8x128xi32>
    %44 = arith.cmpi sge, %22, %43 : vector<8x128xi32>
    %c8_i32 = arith.constant 8 : i32
    %45 = vector.broadcast %c8_i32 : i32 to vector<8x128xi32>
    %46 = arith.cmpi slt, %22, %45 : vector<8x128xi32>
    %47 = arith.andi %44, %46 : vector<8x128xi1>
    %cst_25 = arith.constant -1.000000e+30 : f32
    %48 = vector.broadcast %cst_25 : f32 to vector<8x128xf32>
    %49 = arith.select %47, %21, %48 : vector<8x128xi1>, vector<8x128xf32>
    %cst_26 = arith.constant dense<0xFF800000> : vector<8xf32>
    %50 = vector.multi_reduction <maximumf>, %49, %cst_26 [1] : vector<8x128xf32> to vector<8xf32>
    %51 = vector.shape_cast %50 : vector<8xf32> to vector<8x1xf32>
    %52 = vector.broadcast %51 : vector<8x1xf32> to vector<8x128xf32>
    %53 = arith.subf %49, %52 : vector<8x128xf32>
    %54 = math.exp %53 : vector<8x128xf32>
    %cst_27 = arith.constant 0.000000e+00 : f32
    %55 = vector.broadcast %cst_27 : f32 to vector<8x128xf32>
    %56 = arith.select %47, %54, %55 : vector<8x128xi1>, vector<8x128xf32>
    %cst_28 = arith.constant dense<0.000000e+00> : vector<8xf32>
    %57 = vector.multi_reduction <add>, %56, %cst_28 [1] : vector<8x128xf32> to vector<8xf32>
    %58 = vector.shape_cast %57 : vector<8xf32> to vector<8x1xf32>
    %59 = vector.broadcast %58 : vector<8x1xf32> to vector<8x128xf32>
    %60 = arith.divf %56, %59 : vector<8x128xf32>
    %61 = arith.addf %42, %60 : vector<8x128xf32>
    %c8_i32_29 = arith.constant 8 : i32
    %62 = vector.broadcast %c8_i32_29 : i32 to vector<8x128xi32>
    %63 = arith.cmpi sge, %22, %62 : vector<8x128xi32>
    %c15_i32 = arith.constant 15 : i32
    %64 = vector.broadcast %c15_i32 : i32 to vector<8x128xi32>
    %65 = arith.cmpi slt, %22, %64 : vector<8x128xi32>
    %66 = arith.andi %63, %65 : vector<8x128xi1>
    %cst_30 = arith.constant -1.000000e+30 : f32
    %67 = vector.broadcast %cst_30 : f32 to vector<8x128xf32>
    %68 = arith.select %66, %21, %67 : vector<8x128xi1>, vector<8x128xf32>
    %cst_31 = arith.constant dense<0xFF800000> : vector<8xf32>
    %69 = vector.multi_reduction <maximumf>, %68, %cst_31 [1] : vector<8x128xf32> to vector<8xf32>
    %70 = vector.shape_cast %69 : vector<8xf32> to vector<8x1xf32>
    %71 = vector.broadcast %70 : vector<8x1xf32> to vector<8x128xf32>
    %72 = arith.subf %68, %71 : vector<8x128xf32>
    %73 = math.exp %72 : vector<8x128xf32>
    %cst_32 = arith.constant 0.000000e+00 : f32
    %74 = vector.broadcast %cst_32 : f32 to vector<8x128xf32>
    %75 = arith.select %66, %73, %74 : vector<8x128xi1>, vector<8x128xf32>
    %cst_33 = arith.constant dense<0.000000e+00> : vector<8xf32>
    %76 = vector.multi_reduction <add>, %75, %cst_33 [1] : vector<8x128xf32> to vector<8xf32>
    %77 = vector.shape_cast %76 : vector<8xf32> to vector<8x1xf32>
    %78 = vector.broadcast %77 : vector<8x1xf32> to vector<8x128xf32>
    %79 = arith.divf %75, %78 : vector<8x128xf32>
    %80 = arith.addf %61, %79 : vector<8x128xf32>
    %c0_34 = arith.constant 0 : index
    %c0_35 = arith.constant 0 : index
    %81 = vector.load %arg8[%c0_34, %c0_35] : memref<8x128xf32, #tpu.memory_space<vmem>>, vector<8x128xf32>
    tpu.vector_store %arg8[%c0_34, %c0_35], %80 {strides = array<i32>} : memref<8x128xf32, #tpu.memory_space<vmem>>, vector<8x128xf32>,
    return
  }
}

</mosaic_0001>

<llo_original>
// kernel: tpu_custom_call.1
$region0: #{tpu_custom_call.1}
  #allocation0 [shape = 'u32[]', space=smem, size = 0x4, offset = 0x4, fixed_abs, tag = 'smem constant byte address 0x4 - core index']
  #allocation1 [shape = 'u32[144,128]{1,0:T(1,128)}', space=vmem, size = 0x12000, scoped, tag = 'internal scratch']
  %s0 = inlined_call_operand.hbm [shape: bf16[512,128], index: 0, kind: input, shape index: {}]
  %s1 = inlined_call_operand.hbm [shape: f32[8,512], index: 1, kind: input, shape index: {}]
  %s2 = inlined_call_operand.hbm [shape: bf16[128,128], index: 2, kind: input, shape index: {}]
  %s3 = inlined_call_operand.vmem [shape: f32[1,128], index: 3, kind: input, shape index: {}]
  %s4 = inlined_call_operand.hbm [shape: bf16[128,128], index: 4, kind: input, shape index: {}]
  %s5 = inlined_call_operand.vmem [shape: f32[1,128], index: 5, kind: input, shape index: {}]
  %s6 = inlined_call_operand.hbm [shape: bf16[128,128], index: 6, kind: input, shape index: {}]
  %s7 = inlined_call_operand.vmem [shape: f32[1,128], index: 7, kind: input, shape index: {}]
  %s8 = inlined_call_operand.hbm [shape: f32[8,128], index: 8, kind: output, shape index: {}]
  %s9 = sld [smem:[#allocation0]]
  $region62: #{tpu_custom_call.1} parent=0
    _
  %s11 = ssub.s32 1, %s9
  %s12 = scalar_select 0, %s11, %s9
  $region1: #{tpu_custom_call.1} parent=0
    #allocation2 [shape = 'u8[131072]{0}', space=vmem, size = 0x20000, scoped, tag = 'input window, operand 0, single buffered']
    #allocation3 [shape = 's32[1]{0}', space=sflag, size = 0x4, scoped, tag = 'scoped memory for tpu_custom_call.1']
    #allocation4 [shape = 's32[1]{0}', space=sflag, size = 0x4, scoped, tag = 'scoped memory for tpu_custom_call.1']
    #allocation5 [shape = 'u8[16384]{0}', space=vmem, size = 0x4000, scoped, tag = 'input window, operand 1, single buffered']
    #allocation6 [shape = 's32[1]{0}', space=sflag, size = 0x4, scoped, tag = 'scoped memory for tpu_custom_call.1']
    #allocation7 [shape = 'u8[32768]{0}', space=vmem, size = 0x8000, scoped, tag = 'input window, operand 2, single buffered']
    #allocation8 [shape = 'u8[32768]{0}', space=vmem, size = 0x8000, scoped, tag = 'input window, operand 4, single buffered']
    #allocation9 [shape = 's32[1]{0}', space=sflag, size = 0x4, scoped, tag = 'scoped memory for tpu_custom_call.1']
    #allocation10 [shape = 'u8[32768]{0}', space=vmem, size = 0x8000, scoped, tag = 'input window, operand 6, single buffered']
    #allocation11 [shape = 'u8[4096]{0}', space=vmem, size = 0x1000, scoped, tag = 'output window, operand 0, single buffered']
    %13 = vsyncpa [#allocation3], 0
    %14 = vsyncpa [#allocation6], 0
    %15 = vsyncpa [#allocation9], 0
    %16 = vsyncpa [#allocation4], 0
    // Predicated region
    $region2: #{tpu_custom_call.1} parent=1 // pred_check
      _
    $region3: #{tpu_custom_call.1} parent=1 // pred_check_branch
      %18 = sbr.rel (0) target = $region5
    $region4: #{tpu_custom_call.1} parent=1 // pred_region
      %s20 = ssub.s32 4096, 4096
      %21 = vsyncadd [#allocation3], %s20
      %s22 = sshll.u32 [#allocation2], 4
      %s23 = int_to_ptr.vmem [resolvable:$true] %s22
      %28 = dma.hbm_to_vmem [thread:$0]  %s0, 4096, %s23, [#allocation3], 64, 64, 4
    $region5: #{tpu_custom_call.1} parent=1 // pred_fallthru
      _
    // Predicated region
    $region6: #{tpu_custom_call.1} parent=1 // pred_check
      _
    $region7: #{tpu_custom_call.1} parent=1 // pred_check_branch
      %30 = sbr.rel (0) target = $region9
    $region8: #{tpu_custom_call.1} parent=1 // pred_region
      %s32 = ssub.s32 512, 512
      %33 = vsyncadd [#allocation6], %s32
      %s35 = sshll.u32 [#allocation5], 4
      %s36 = int_to_ptr.vmem [resolvable:$true] %s35
      %38 = dma.hbm_to_vmem [thread:$0]  %s1, 512, %s36, [#allocation6]
    $region9: #{tpu_custom_call.1} parent=1 // pred_fallthru
      _
    // Predicated region
    $region10: #{tpu_custom_call.1} parent=1 // pred_check
      _
    $region11: #{tpu_custom_call.1} parent=1 // pred_check_branch
      %40 = sbr.rel (0) target = $region13
    $region12: #{tpu_custom_call.1} parent=1 // pred_region
      %s42 = ssub.s32 1024, 1024
      %43 = vsyncadd [#allocation6], %s42
      %s44 = sshll.u32 [#allocation7], 4
      %s45 = int_to_ptr.vmem [resolvable:$true] %s44
      %50 = dma.hbm_to_vmem [thread:$0]  %s2, 1024, %s45, [#allocation6], 64, 64, 4
    $region13: #{tpu_custom_call.1} parent=1 // pred_fallthru
      _
    // Predicated region
    $region14: #{tpu_custom_call.1} parent=1 // pred_check
      _
    $region15: #{tpu_custom_call.1} parent=1 // pred_check_branch
      %52 = sbr.rel (0) target = $region17
    $region16: #{tpu_custom_call.1} parent=1 // pred_region
      _
    $region17: #{tpu_custom_call.1} parent=1 // pred_fallthru
      _
    // Predicated region
    $region18: #{tpu_custom_call.1} parent=1 // pred_check
      _
    $region19: #{tpu_custom_call.1} parent=1 // pred_check_branch
      %54 = sbr.rel (0) target = $region21
    $region20: #{tpu_custom_call.1} parent=1 // pred_region
      %s56 = ssub.s32 1024, 1024
      %57 = vsyncadd [#allocation9], %s56
      %s58 = sshll.u32 [#allocation8], 4
      %s59 = int_to_ptr.vmem [resolvable:$true] %s58
      %64 = dma.hbm_to_vmem [thread:$0]  %s4, 1024, %s59, [#allocation9], 64, 64, 4
    $region21: #{tpu_custom_call.1} parent=1 // pred_fallthru
      _
    // Predicated region
    $region22: #{tpu_custom_call.1} parent=1 // pred_check
      _
    $region23: #{tpu_custom_call.1} parent=1 // pred_check_branch
      %66 = sbr.rel (0) target = $region25
    $region24: #{tpu_custom_call.1} parent=1 // pred_region
      _
    $region25: #{tpu_custom_call.1} parent=1 // pred_fallthru
      _
    // Predicated region
    $region26: #{tpu_custom_call.1} parent=1 // pred_check
      _
    $region27: #{tpu_custom_call.1} parent=1 // pred_check_branch
      %68 = sbr.rel (0) target = $region29
    $region28: #{tpu_custom_call.1} parent=1 // pred_region
      %s70 = ssub.s32 1024, 1024
      %71 = vsyncadd [#allocation9], %s70
      %s72 = sshll.u32 [#allocation10], 4
      %s73 = int_to_ptr.vmem [resolvable:$true] %s72
      %78 = dma.hbm_to_vmem [thread:$0]  %s6, 1024, %s73, [#allocation9], 64, 64, 4
    $region29: #{tpu_custom_call.1} parent=1 // pred_fallthru
      _
    // Predicated region
    $region30: #{tpu_custom_call.1} parent=1 // pred_check
      _
    $region31: #{tpu_custom_call.1} parent=1 // pred_check_branch
      %80 = sbr.rel (0) target = $region33
    $region32: #{tpu_custom_call.1} parent=1 // pred_region
      _
    $region33: #{tpu_custom_call.1} parent=1 // pred_fallthru
      _
    // Predicated region
    $region34: #{tpu_custom_call.1} parent=1 // pred_check
      _
    $region35: #{tpu_custom_call.1} parent=1 // pred_check_branch
      %82 = sbr.rel (0) target = $region37
    $region36: #{tpu_custom_call.1} parent=1 // pred_region
      %83 = dma.done [#allocation3], 4096
    $region37: #{tpu_custom_call.1} parent=1 // pred_fallthru
      _
    // Predicated region
    $region38: #{tpu_custom_call.1} parent=1 // pred_check
      _
    $region39: #{tpu_custom_call.1} parent=1 // pred_check_branch
      %85 = sbr.rel (0) target = $region41
    $region40: #{tpu_custom_call.1} parent=1 // pred_region
      %86 = dma.done [#allocation6], 512
    $region41: #{tpu_custom_call.1} parent=1 // pred_fallthru
      _
    // Predicated region
    $region42: #{tpu_custom_call.1} parent=1 // pred_check
      _
    $region43: #{tpu_custom_call.1} parent=1 // pred_check_branch
      %88 = sbr.rel (0) target = $region45
    $region44: #{tpu_custom_call.1} parent=1 // pred_region
      %89 = dma.done [#allocation6], 1024
    $region45: #{tpu_custom_call.1} parent=1 // pred_fallthru
      _
    // Predicated region
    $region46: #{tpu_custom_call.1} parent=1 // pred_check
      _
    $region47: #{tpu_custom_call.1} parent=1 // pred_check_branch
      %91 = sbr.rel (0) target = $region49
    $region48: #{tpu_custom_call.1} parent=1 // pred_region
      %92 = dma.done [#allocation9], 1024
    $region49: #{tpu_custom_call.1} parent=1 // pred_fallthru
      _
    // Predicated region
    $region50: #{tpu_custom_call.1} parent=1 // pred_check
      _
    $region51: #{tpu_custom_call.1} parent=1 // pred_check_branch
      %94 = sbr.rel (0) target = $region53
    $region52: #{tpu_custom_call.1} parent=1 // pred_region
      %95 = dma.done [#allocation9], 1024
    $region53: #{tpu_custom_call.1} parent=1 // pred_fallthru
      _
    %v97 = vld [vmem:[#allocation2] sm:$0xf]
    %v98 = vld [vmem:[#allocation2 + $0x4] sm:$0xf]
    %v99 = vld [vmem:[#allocation2 + $0x8] sm:$0xf]
    %v100 = vld [vmem:[#allocation2 + $0xc] sm:$0xf]
    %v101 = vld [vmem:[#allocation2 + $0x10] sm:$0xf]
    %v102 = vld [vmem:[#allocation2 + $0x14] sm:$0xf]
    %v103 = vld [vmem:[#allocation2 + $0x18] sm:$0xf]
    %v104 = vld [vmem:[#allocation2 + $0x1c] sm:$0xf]
    %v105 = vld [vmem:[#allocation2 + $0x20] sm:$0xf]
    %v106 = vld [vmem:[#allocation2 + $0x24] sm:$0xf]
    %v107 = vld [vmem:[#allocation2 + $0x28] sm:$0xf]
    %v108 = vld [vmem:[#allocation2 + $0x2c] sm:$0xf]
    %v109 = vld [vmem:[#allocation2 + $0x30] sm:$0xf]
    %v110 = vld [vmem:[#allocation2 + $0x34] sm:$0xf]
    %v111 = vld [vmem:[#allocation2 + $0x38] sm:$0xf]
    %v112 = vld [vmem:[#allocation2 + $0x3c] sm:$0xf]
    %v113 = vld [vmem:[#allocation2 + $0x40] sm:$0xf]
    %v114 = vld [vmem:[#allocation2 + $0x44] sm:$0xf]
    %v115 = vld [vmem:[#allocation2 + $0x48] sm:$0xf]
    %v116 = vld [vmem:[#allocation2 + $0x4c] sm:$0xf]
    %v117 = vld [vmem:[#allocation2 + $0x50] sm:$0xf]
    %v118 = vld [vmem:[#allocation2 + $0x54] sm:$0xf]
    %v119 = vld [vmem:[#allocation2 + $0x58] sm:$0xf]
    %v120 = vld [vmem:[#allocation2 + $0x5c] sm:$0xf]
    %v121 = vld [vmem:[#allocation2 + $0x60] sm:$0xf]
    %v122 = vld [vmem:[#allocation2 + $0x64] sm:$0xf]
    %v123 = vld [vmem:[#allocation2 + $0x68] sm:$0xf]
    %v124 = vld [vmem:[#allocation2 + $0x6c] sm:$0xf]
    %v125 = vld [vmem:[#allocation2 + $0x70] sm:$0xf]
    %v126 = vld [vmem:[#allocation2 + $0x74] sm:$0xf]
    %v127 = vld [vmem:[#allocation2 + $0x78] sm:$0xf]
    %v128 = vld [vmem:[#allocation2 + $0x7c] sm:$0xf]
    %v129 = vld [vmem:[#allocation2 + $0x80] sm:$0xf]
    %v130 = vld [vmem:[#allocation2 + $0x84] sm:$0xf]
    %v131 = vld [vmem:[#allocation2 + $0x88] sm:$0xf]
    %v132 = vld [vmem:[#allocation2 + $0x8c] sm:$0xf]
    %v133 = vld [vmem:[#allocation2 + $0x90] sm:$0xf]
    %v134 = vld [vmem:[#allocation2 + $0x94] sm:$0xf]
    %v135 = vld [vmem:[#allocation2 + $0x98] sm:$0xf]
    %v136 = vld [vmem:[#allocation2 + $0x9c] sm:$0xf]
    %v137 = vld [vmem:[#allocation2 + $0xa0] sm:$0xf]
    %v138 = vld [vmem:[#allocation2 + $0xa4] sm:$0xf]
    %v139 = vld [vmem:[#allocation2 + $0xa8] sm:$0xf]
    %v140 = vld [vmem:[#allocation2 + $0xac] sm:$0xf]
    %v141 = vld [vmem:[#allocation2 + $0xb0] sm:$0xf]
    %v142 = vld [vmem:[#allocation2 + $0xb4] sm:$0xf]
    %v143 = vld [vmem:[#allocation2 + $0xb8] sm:$0xf]
    %v144 = vld [vmem:[#allocation2 + $0xbc] sm:$0xf]
    %v145 = vld [vmem:[#allocation2 + $0xc0] sm:$0xf]
    %v146 = vld [vmem:[#allocation2 + $0xc4] sm:$0xf]
    %v147 = vld [vmem:[#allocation2 + $0xc8] sm:$0xf]
    %v148 = vld [vmem:[#allocation2 + $0xcc] sm:$0xf]
    %v149 = vld [vmem:[#allocation2 + $0xd0] sm:$0xf]
    %v150 = vld [vmem:[#allocation2 + $0xd4] sm:$0xf]
    %v151 = vld [vmem:[#allocation2 + $0xd8] sm:$0xf]
    %v152 = vld [vmem:[#allocation2 + $0xdc] sm:$0xf]
    %v153 = vld [vmem:[#allocation2 + $0xe0] sm:$0xf]
    %v154 = vld [vmem:[#allocation2 + $0xe4] sm:$0xf]
    %v155 = vld [vmem:[#allocation2 + $0xe8] sm:$0xf]
    %v156 = vld [vmem:[#allocation2 + $0xec] sm:$0xf]
    %v157 = vld [vmem:[#allocation2 + $0xf0] sm:$0xf]
    %v158 = vld [vmem:[#allocation2 + $0xf4] sm:$0xf]
    %v159 = vld [vmem:[#allocation2 + $0xf8] sm:$0xf]
    %v160 = vld [vmem:[#allocation2 + $0xfc] sm:$0xf]
    %v161 = vld [vmem:[#allocation7] sm:$0xf]
    %v162 = vld [vmem:[#allocation7 + $0x4] sm:$0xf]
    %v163 = vld [vmem:[#allocation7 + $0x8] sm:$0xf]
    %v164 = vld [vmem:[#allocation7 + $0xc] sm:$0xf]
    %v165 = vld [vmem:[#allocation7 + $0x10] sm:$0xf]
    %v166 = vld [vmem:[#allocation7 + $0x14] sm:$0xf]
    %v167 = vld [vmem:[#allocation7 + $0x18] sm:$0xf]
    %v168 = vld [vmem:[#allocation7 + $0x1c] sm:$0xf]
    %v169 = vld [vmem:[#allocation7 + $0x20] sm:$0xf]
    %v170 = vld [vmem:[#allocation7 + $0x24] sm:$0xf]
    %v171 = vld [vmem:[#allocation7 + $0x28] sm:$0xf]
    %v172 = vld [vmem:[#allocation7 + $0x2c] sm:$0xf]
    %v173 = vld [vmem:[#allocation7 + $0x30] sm:$0xf]
    %v174 = vld [vmem:[#allocation7 + $0x34] sm:$0xf]
    %v175 = vld [vmem:[#allocation7 + $0x38] sm:$0xf]
    %v176 = vld [vmem:[#allocation7 + $0x3c] sm:$0xf]
    %v177 = vld [vmem:[%s3] sm:$0x1]
    %v179 = vlaneseq
    %v180 = vshrl.u32 %v179, 7
    %v181 = vsub.s32 0, %v180
    %v182 = vrot.slane %v177, %v181
    %v248 = vunpack.c.l.b16 %v97
    %v249 = vunpack.c.l.b16 %v98
    %v250 = vunpack.c.l.b16 %v99
    %v251 = vunpack.c.l.b16 %v100
    %v252 = vunpack.c.l.b16 %v101
    %v253 = vunpack.c.l.b16 %v102
    %v254 = vunpack.c.l.b16 %v103
    %v255 = vunpack.c.l.b16 %v104
    %v256 = vunpack.c.l.b16 %v105
    %v257 = vunpack.c.l.b16 %v106
    %v258 = vunpack.c.l.b16 %v107
    %v259 = vunpack.c.l.b16 %v108
    %v260 = vunpack.c.l.b16 %v109
    %v261 = vunpack.c.l.b16 %v110
    %v262 = vunpack.c.l.b16 %v111
    %v263 = vunpack.c.l.b16 %v112
    %v264 = vunpack.c.l.b16 %v113
    %v265 = vunpack.c.l.b16 %v114
    %v266 = vunpack.c.l.b16 %v115
    %v267 = vunpack.c.l.b16 %v116
    %v268 = vunpack.c.l.b16 %v117
    %v269 = vunpack.c.l.b16 %v118
    %v270 = vunpack.c.l.b16 %v119
    %v271 = vunpack.c.l.b16 %v120
    %v272 = vunpack.c.l.b16 %v121
    %v273 = vunpack.c.l.b16 %v122
    %v274 = vunpack.c.l.b16 %v123
    %v275 = vunpack.c.l.b16 %v124
    %v276 = vunpack.c.l.b16 %v125
    %v277 = vunpack.c.l.b16 %v126
    %v278 = vunpack.c.l.b16 %v127
    %v279 = vunpack.c.l.b16 %v128
    %v280 = vunpack.c.l.b16 %v129
    %v281 = vunpack.c.l.b16 %v130
    %v282 = vunpack.c.l.b16 %v131
    %v283 = vunpack.c.l.b16 %v132
    %v284 = vunpack.c.l.b16 %v133
    %v285 = vunpack.c.l.b16 %v134
    %v286 = vunpack.c.l.b16 %v135
    %v287 = vunpack.c.l.b16 %v136
    %v288 = vunpack.c.l.b16 %v137
    %v289 = vunpack.c.l.b16 %v138
    %v290 = vunpack.c.l.b16 %v139
    %v291 = vunpack.c.l.b16 %v140
    %v292 = vunpack.c.l.b16 %v141
    %v293 = vunpack.c.l.b16 %v142
    %v294 = vunpack.c.l.b16 %v143
    %v295 = vunpack.c.l.b16 %v144
    %v296 = vunpack.c.l.b16 %v145
    %v297 = vunpack.c.l.b16 %v146
    %v298 = vunpack.c.l.b16 %v147
    %v299 = vunpack.c.l.b16 %v148
    %v300 = vunpack.c.l.b16 %v149
    %v301 = vunpack.c.l.b16 %v150
    %v302 = vunpack.c.l.b16 %v151
    %v303 = vunpack.c.l.b16 %v152
    %v304 = vunpack.c.l.b16 %v153
    %v305 = vunpack.c.l.b16 %v154
    %v306 = vunpack.c.l.b16 %v155
    %v307 = vunpack.c.l.b16 %v156
    %v308 = vunpack.c.l.b16 %v157
    %v309 = vunpack.c.l.b16 %v158
    %v310 = vunpack.c.l.b16 %v159
    %v311 = vunpack.c.l.b16 %v160
    %v312 = vpack.c.b16 %v249, %v248
    %v313 = vpack.c.b16 %v251, %v250
    %v314 = vpack.c.b16 %v253, %v252
    %v315 = vpack.c.b16 %v255, %v254
    %v316 = vpack.c.b16 %v257, %v256
    %v317 = vpack.c.b16 %v259, %v258
    %v318 = vpack.c.b16 %v261, %v260
    %v319 = vpack.c.b16 %v263, %v262
    %v320 = vpack.c.b16 %v265, %v264
    %v321 = vpack.c.b16 %v267, %v266
    %v322 = vpack.c.b16 %v269, %v268
    %v323 = vpack.c.b16 %v271, %v270
    %v324 = vpack.c.b16 %v273, %v272
    %v325 = vpack.c.b16 %v275, %v274
    %v326 = vpack.c.b16 %v277, %v276
    %v327 = vpack.c.b16 %v279, %v278
    %v328 = vpack.c.b16 %v281, %v280
    %v329 = vpack.c.b16 %v283, %v282
    %v330 = vpack.c.b16 %v285, %v284
    %v331 = vpack.c.b16 %v287, %v286
    %v332 = vpack.c.b16 %v289, %v288
    %v333 = vpack.c.b16 %v291, %v290
    %v334 = vpack.c.b16 %v293, %v292
    %v335 = vpack.c.b16 %v295, %v294
    %v336 = vpack.c.b16 %v297, %v296
    %v337 = vpack.c.b16 %v299, %v298
    %v338 = vpack.c.b16 %v301, %v300
    %v339 = vpack.c.b16 %v303, %v302
    %v340 = vpack.c.b16 %v305, %v304
    %v341 = vpack.c.b16 %v307, %v306
    %v342 = vpack.c.b16 %v309, %v308
    %v343 = vpack.c.b16 %v311, %v310
    %v392 = vunpack.c.l.b16 %v161
    %v393 = vunpack.c.l.b16 %v162
    %v394 = vunpack.c.l.b16 %v163
    %v395 = vunpack.c.l.b16 %v164
    %v396 = vunpack.c.l.b16 %v165
    %v397 = vunpack.c.l.b16 %v166
    %v398 = vunpack.c.l.b16 %v167
    %v399 = vunpack.c.l.b16 %v168
    %v400 = vunpack.c.l.b16 %v169
    %v401 = vunpack.c.l.b16 %v170
    %v402 = vunpack.c.l.b16 %v171
    %v403 = vunpack.c.l.b16 %v172
    %v404 = vunpack.c.l.b16 %v173
    %v405 = vunpack.c.l.b16 %v174
    %v406 = vunpack.c.l.b16 %v175
    %v407 = vunpack.c.l.b16 %v176
    %v408 = vpack.c.b16 %v393, %v392
    %v409 = vpack.c.b16 %v395, %v394
    %v410 = vpack.c.b16 %v397, %v396
    %v411 = vpack.c.b16 %v399, %v398
    %v412 = vpack.c.b16 %v401, %v400
    %v413 = vpack.c.b16 %v403, %v402
    %v414 = vpack.c.b16 %v405, %v404
    %v415 = vpack.c.b16 %v407, %v406
    %424 = vmatprep.subr.bf16.mxu0 0
    %425 = vmatpush1.bf16.msra.mxu0 %v408
    %426 = vmatprep.subr.bf16.mxu0 0
    %427 = vmatpush1.bf16.msra.mxu0 %v409
    %428 = vmatprep.subr.bf16.mxu0 0
    %429 = vmatpush1.bf16.msra.mxu0 %v410
    %430 = vmatprep.subr.bf16.mxu0 0
    %431 = vmatpush1.bf16.msra.mxu0 %v411
    %432 = vmatprep.subr.bf16.mxu0 0
    %433 = vmatpush1.bf16.msra.mxu0 %v412
    %434 = vmatprep.subr.bf16.mxu0 0
    %435 = vmatpush1.bf16.msra.mxu0 %v413
    %436 = vmatprep.subr.bf16.mxu0 0
    %437 = vmatpush1.bf16.msra.mxu0 %v414
    %438 = vmatprep.subr.bf16.mxu0 0
    %439 = vmatpush1.bf16.msra.mxu0 %v415
    %440 = vmatprep.subr.bf16.mxu0 0
    %441 = vmatpush1.bf16.msra.mxu0 0
    %442 = vmatprep.subr.bf16.mxu0 0
    %443 = vmatpush1.bf16.msra.mxu0 0
    %444 = vmatprep.subr.bf16.mxu0 0
    %445 = vmatpush1.bf16.msra.mxu0 0
    %446 = vmatprep.subr.bf16.mxu0 0
    %447 = vmatpush1.bf16.msra.mxu0 0
    %448 = vmatprep.subr.bf16.mxu0 0
    %449 = vmatpush1.bf16.msra.mxu0 0
    %450 = vmatprep.subr.bf16.mxu0 0
    %451 = vmatpush1.bf16.msra.mxu0 0
    %452 = vmatprep.subr.bf16.mxu0 0
    %453 = vmatpush1.bf16.msra.mxu0 0
    %454 = vmatprep.subr.bf16.mxu0 0
    %455 = vmatpush1.bf16.msra.mxu0 0
    %456 = vmatprep.mubr.bf16.mxu0 0
    %457 = vmatmul.mubr.bf16.gmra.mrb[0].mxu0 %v312
    %v458 = vpop.f32.mrb[0].mxu0
    %v459 = vadd.f32 %v182, %v458
    %v460 = vpop.f32.mrb[0].mxu0
    %v461 = vpop.f32.mrb[0].mxu0
    %v462 = vadd.f32 %v182, %v461
    %v463 = vpop.f32.mrb[0].mxu0
    %464 = vmatprep.mubr.bf16.mxu0 0
    %465 = vmatmul.mubr.bf16.gmra.mrb[0].mxu0 %v313
    %v466 = vpop.f32.mrb[0].mxu0
    %v467 = vadd.f32 %v182, %v466
    %v468 = vpop.f32.mrb[0].mxu0
    %v469 = vpop.f32.mrb[0].mxu0
    %v470 = vadd.f32 %v182, %v469
    %v471 = vpop.f32.mrb[0].mxu0
    %472 = vmatprep.mubr.bf16.mxu0 0
    %473 = vmatmul.mubr.bf16.gmra.mrb[0].mxu0 %v314
    %v474 = vpop.f32.mrb[0].mxu0
    %v475 = vadd.f32 %v182, %v474
    %v476 = vpop.f32.mrb[0].mxu0
    %v477 = vpop.f32.mrb[0].mxu0
    %v478 = vadd.f32 %v182, %v477
    %v479 = vpop.f32.mrb[0].mxu0
    %480 = vmatprep.mubr.bf16.mxu0 0
    %481 = vmatmul.mubr.bf16.gmra.mrb[0].mxu0 %v315
    %v482 = vpop.f32.mrb[0].mxu0
    %v483 = vadd.f32 %v182, %v482
    %v484 = vpop.f32.mrb[0].mxu0
    %v485 = vpop.f32.mrb[0].mxu0
    %v486 = vadd.f32 %v182, %v485
    %v487 = vpop.f32.mrb[0].mxu0
    %488 = vmatprep.mubr.bf16.mxu0 0
    %489 = vmatmul.mubr.bf16.gmra.mrb[0].mxu0 %v316
    %v490 = vpop.f32.mrb[0].mxu0
    %v491 = vadd.f32 %v182, %v490
    %v492 = vpop.f32.mrb[0].mxu0
    %v493 = vpop.f32.mrb[0].mxu0
    %v494 = vadd.f32 %v182, %v493
    %v495 = vpop.f32.mrb[0].mxu0
    %496 = vmatprep.mubr.bf16.mxu0 0
    %497 = vmatmul.mubr.bf16.gmra.mrb[0].mxu0 %v317
    %v498 = vpop.f32.mrb[0].mxu0
    %v499 = vadd.f32 %v182, %v498
    %v500 = vpop.f32.mrb[0].mxu0
    %v501 = vpop.f32.mrb[0].mxu0
    %v502 = vadd.f32 %v182, %v501
    %v503 = vpop.f32.mrb[0].mxu0
    %504 = vmatprep.mubr.bf16.mxu0 0
    %505 = vmatmul.mubr.bf16.gmra.mrb[0].mxu0 %v318
    %v506 = vpop.f32.mrb[0].mxu0
    %v507 = vadd.f32 %v182, %v506
    %v508 = vpop.f32.mrb[0].mxu0
    %v509 = vpop.f32.mrb[0].mxu0
    %v510 = vadd.f32 %v182, %v509
    %v511 = vpop.f32.mrb[0].mxu0
    %512 = vmatprep.mubr.bf16.mxu0 0
    %513 = vmatmul.mubr.bf16.gmra.mrb[0].mxu0 %v319
    %v514 = vpop.f32.mrb[0].mxu0
    %v515 = vadd.f32 %v182, %v514
    %v516 = vpop.f32.mrb[0].mxu0
    %v517 = vpop.f32.mrb[0].mxu0
    %v518 = vadd.f32 %v182, %v517
    %v519 = vpop.f32.mrb[0].mxu0
    %520 = vmatprep.mubr.bf16.mxu0 0
    %521 = vmatmul.mubr.bf16.gmra.mrb[0].mxu0 %v320
    %v522 = vpop.f32.mrb[0].mxu0
    %v523 = vadd.f32 %v182, %v522
    %v524 = vpop.f32.mrb[0].mxu0
    %v525 = vpop.f32.mrb[0].mxu0
    %v526 = vadd.f32 %v182, %v525
    %v527 = vpop.f32.mrb[0].mxu0
    %528 = vmatprep.mubr.bf16.mxu0 0
    %529 = vmatmul.mubr.bf16.gmra.mrb[0].mxu0 %v321
    %v530 = vpop.f32.mrb[0].mxu0
    %v531 = vadd.f32 %v182, %v530
    %v532 = vpop.f32.mrb[0].mxu0
    %v533 = vpop.f32.mrb[0].mxu0
    %v534 = vadd.f32 %v182, %v533
    %v535 = vpop.f32.mrb[0].mxu0
    %536 = vmatprep.mubr.bf16.mxu0 0
    %537 = vmatmul.mubr.bf16.gmra.mrb[0].mxu0 %v322
    %v538 = vpop.f32.mrb[0].mxu0
    %v539 = vadd.f32 %v182, %v538
    %v540 = vpop.f32.mrb[0].mxu0
    %v541 = vpop.f32.mrb[0].mxu0
    %v542 = vadd.f32 %v182, %v541
    %v543 = vpop.f32.mrb[0].mxu0
    %544 = vmatprep.mubr.bf16.mxu0 0
    %545 = vmatmul.mubr.bf16.gmra.mrb[0].mxu0 %v323
    %v546 = vpop.f32.mrb[0].mxu0
    %v547 = vadd.f32 %v182, %v546
    %v548 = vpop.f32.mrb[0].mxu0
    %v549 = vpop.f32.mrb[0].mxu0
    %v550 = vadd.f32 %v182, %v549
    %v551 = vpop.f32.mrb[0].mxu0
    %552 = vmatprep.mubr.bf16.mxu0 0
    %553 = vmatmul.mubr.bf16.gmra.mrb[0].mxu0 %v324
    %v554 = vpop.f32.mrb[0].mxu0
    %v555 = vadd.f32 %v182, %v554
    %v556 = vpop.f32.mrb[0].mxu0
    %v557 = vpop.f32.mrb[0].mxu0
    %v558 = vadd.f32 %v182, %v557
    %v559 = vpop.f32.mrb[0].mxu0
    %560 = vmatprep.mubr.bf16.mxu0 0
    %561 = vmatmul.mubr.bf16.gmra.mrb[0].mxu0 %v325
    %v562 = vpop.f32.mrb[0].mxu0
    %v563 = vadd.f32 %v182, %v562
    %v564 = vpop.f32.mrb[0].mxu0
    %v565 = vpop.f32.mrb[0].mxu0
    %v566 = vadd.f32 %v182, %v565
    %v567 = vpop.f32.mrb[0].mxu0
    %568 = vmatprep.mubr.bf16.mxu0 0
    %569 = vmatmul.mubr.bf16.gmra.mrb[0].mxu0 %v326
    %v570 = vpop.f32.mrb[0].mxu0
    %v571 = vadd.f32 %v182, %v570
    %v572 = vpop.f32.mrb[0].mxu0
    %v573 = vpop.f32.mrb[0].mxu0
    %v574 = vadd.f32 %v182, %v573
    %v575 = vpop.f32.mrb[0].mxu0
    %576 = vmatprep.mubr.bf16.mxu0 0
    %577 = vmatmul.mubr.bf16.gmra.mrb[0].mxu0 %v327
    %v578 = vpop.f32.mrb[0].mxu0
    %v579 = vadd.f32 %v182, %v578
    %v580 = vpop.f32.mrb[0].mxu0
    %v581 = vpop.f32.mrb[0].mxu0
    %v582 = vadd.f32 %v182, %v581
    %v583 = vpop.f32.mrb[0].mxu0
    %584 = vmatprep.mubr.bf16.mxu0 0
    %585 = vmatmul.mubr.bf16.gmra.mrb[0].mxu0 %v328
    %v586 = vpop.f32.mrb[0].mxu0
    %v587 = vadd.f32 %v182, %v586
    %v588 = vpop.f32.mrb[0].mxu0
    %v589 = vpop.f32.mrb[0].mxu0
    %v590 = vadd.f32 %v182, %v589
    %v591 = vpop.f32.mrb[0].mxu0
    %592 = vmatprep.mubr.bf16.mxu0 0
    %593 = vmatmul.mubr.bf16.gmra.mrb[0].mxu0 %v329
    %v594 = vpop.f32.mrb[0].mxu0
    %v595 = vadd.f32 %v182, %v594
    %v596 = vpop.f32.mrb[0].mxu0
    %v597 = vpop.f32.mrb[0].mxu0
    %v598 = vadd.f32 %v182, %v597
    %v599 = vpop.f32.mrb[0].mxu0
    %600 = vmatprep.mubr.bf16.mxu0 0
    %601 = vmatmul.mubr.bf16.gmra.mrb[0].mxu0 %v330
    %v602 = vpop.f32.mrb[0].mxu0
    %v603 = vadd.f32 %v182, %v602
    %v604 = vpop.f32.mrb[0].mxu0
    %v605 = vpop.f32.mrb[0].mxu0
    %v606 = vadd.f32 %v182, %v605
    %v607 = vpop.f32.mrb[0].mxu0
    %608 = vmatprep.mubr.bf16.mxu0 0
    %609 = vmatmul.mubr.bf16.gmra.mrb[0].mxu0 %v331
    %v610 = vpop.f32.mrb[0].mxu0
    %v611 = vadd.f32 %v182, %v610
    %v612 = vpop.f32.mrb[0].mxu0
    %v613 = vpop.f32.mrb[0].mxu0
    %v614 = vadd.f32 %v182, %v613
    %v615 = vpop.f32.mrb[0].mxu0
    %616 = vmatprep.mubr.bf16.mxu0 0
    %617 = vmatmul.mubr.bf16.gmra.mrb[0].mxu0 %v332
    %v618 = vpop.f32.mrb[0].mxu0
    %v619 = vadd.f32 %v182, %v618
    %v620 = vpop.f32.mrb[0].mxu0
    %v621 = vpop.f32.mrb[0].mxu0
    %v622 = vadd.f32 %v182, %v621
    %v623 = vpop.f32.mrb[0].mxu0
    %624 = vmatprep.mubr.bf16.mxu0 0
    %625 = vmatmul.mubr.bf16.gmra.mrb[0].mxu0 %v333
    %v626 = vpop.f32.mrb[0].mxu0
    %v627 = vadd.f32 %v182, %v626
    %v628 = vpop.f32.mrb[0].mxu0
    %v629 = vpop.f32.mrb[0].mxu0
    %v630 = vadd.f32 %v182, %v629
    %v631 = vpop.f32.mrb[0].mxu0
    %632 = vmatprep.mubr.bf16.mxu0 0
    %633 = vmatmul.mubr.bf16.gmra.mrb[0].mxu0 %v334
    %v634 = vpop.f32.mrb[0].mxu0
    %v635 = vadd.f32 %v182, %v634
    %v636 = vpop.f32.mrb[0].mxu0
    %v637 = vpop.f32.mrb[0].mxu0
    %v638 = vadd.f32 %v182, %v637
    %v639 = vpop.f32.mrb[0].mxu0
    %640 = vmatprep.mubr.bf16.mxu0 0
    %641 = vmatmul.mubr.bf16.gmra.mrb[0].mxu0 %v335
    %v642 = vpop.f32.mrb[0].mxu0
    %v643 = vadd.f32 %v182, %v642
    %v644 = vpop.f32.mrb[0].mxu0
    %v645 = vpop.f32.mrb[0].mxu0
    %v646 = vadd.f32 %v182, %v645
    %v647 = vpop.f32.mrb[0].mxu0
    %648 = vmatprep.mubr.bf16.mxu0 0
    %649 = vmatmul.mubr.bf16.gmra.mrb[0].mxu0 %v336
    %v650 = vpop.f32.mrb[0].mxu0
    %v651 = vadd.f32 %v182, %v650
    %v652 = vpop.f32.mrb[0].mxu0
    %v653 = vpop.f32.mrb[0].mxu0
    %v654 = vadd.f32 %v182, %v653
    %v655 = vpop.f32.mrb[0].mxu0
    %656 = vmatprep.mubr.bf16.mxu0 0
    %657 = vmatmul.mubr.bf16.gmra.mrb[0].mxu0 %v337
    %v658 = vpop.f32.mrb[0].mxu0
    %v659 = vadd.f32 %v182, %v658
    %v660 = vpop.f32.mrb[0].mxu0
    %v661 = vpop.f32.mrb[0].mxu0
    %v662 = vadd.f32 %v182, %v661
    %v663 = vpop.f32.mrb[0].mxu0
    %664 = vmatprep.mubr.bf16.mxu0 0
    %665 = vmatmul.mubr.bf16.gmra.mrb[0].mxu0 %v338
    %v666 = vpop.f32.mrb[0].mxu0
    %v667 = vadd.f32 %v182, %v666
    %v668 = vpop.f32.mrb[0].mxu0
    %v669 = vpop.f32.mrb[0].mxu0
    %v670 = vadd.f32 %v182, %v669
    %v671 = vpop.f32.mrb[0].mxu0
    %672 = vmatprep.mubr.bf16.mxu0 0
    %673 = vmatmul.mubr.bf16.gmra.mrb[0].mxu0 %v339
    %v674 = vpop.f32.mrb[0].mxu0
    %v675 = vadd.f32 %v182, %v674
    %v676 = vpop.f32.mrb[0].mxu0
    %v677 = vpop.f32.mrb[0].mxu0
    %v678 = vadd.f32 %v182, %v677
    %v679 = vpop.f32.mrb[0].mxu0
    %680 = vmatprep.mubr.bf16.mxu0 0
    %681 = vmatmul.mubr.bf16.gmra.mrb[0].mxu0 %v340
    %v682 = vpop.f32.mrb[0].mxu0
    %v683 = vadd.f32 %v182, %v682
    %v684 = vpop.f32.mrb[0].mxu0
    %v685 = vpop.f32.mrb[0].mxu0
    %v686 = vadd.f32 %v182, %v685
    %v687 = vpop.f32.mrb[0].mxu0
    %688 = vmatprep.mubr.bf16.mxu0 0
    %689 = vmatmul.mubr.bf16.gmra.mrb[0].mxu0 %v341
    %v690 = vpop.f32.mrb[0].mxu0
    %v691 = vadd.f32 %v182, %v690
    %v692 = vpop.f32.mrb[0].mxu0
    %v693 = vpop.f32.mrb[0].mxu0
    %v694 = vadd.f32 %v182, %v693
    %v695 = vpop.f32.mrb[0].mxu0
    %696 = vmatprep.mubr.bf16.mxu0 0
    %697 = vmatmul.mubr.bf16.gmra.mrb[0].mxu0 %v342
    %v698 = vpop.f32.mrb[0].mxu0
    %v699 = vadd.f32 %v182, %v698
    %v700 = vpop.f32.mrb[0].mxu0
    %v701 = vpop.f32.mrb[0].mxu0
    %v702 = vadd.f32 %v182, %v701
    %v703 = vpop.f32.mrb[0].mxu0
    %704 = vmatprep.mubr.bf16.mxu0 0
    %705 = vmatmul.mubr.bf16.gmra.mrb[0].mxu0 %v343
    %v706 = vpop.f32.mrb[0].mxu0
    %v707 = vadd.f32 %v182, %v706
    %v708 = vpop.f32.mrb[0].mxu0
    %v709 = vpop.f32.mrb[0].mxu0
    %v710 = vadd.f32 %v182, %v709
    %v711 = vpop.f32.mrb[0].mxu0
    %712 = vdwg.mxu0
    %v713 = vmax.f32 %v459, 0.0
    %v714 = vmax.f32 %v462, 0.0
    %v715 = vmax.f32 %v467, 0.0
    %v716 = vmax.f32 %v470, 0.0
    %v717 = vmax.f32 %v475, 0.0
    %v718 = vmax.f32 %v478, 0.0
    %v719 = vmax.f32 %v483, 0.0
    %v720 = vmax.f32 %v486, 0.0
    %v721 = vmax.f32 %v491, 0.0
    %v722 = vmax.f32 %v494, 0.0
    %v723 = vmax.f32 %v499, 0.0
    %v724 = vmax.f32 %v502, 0.0
    %v725 = vmax.f32 %v507, 0.0
    %v726 = vmax.f32 %v510, 0.0
    %v727 = vmax.f32 %v515, 0.0
    %v728 = vmax.f32 %v518, 0.0
    %v729 = vmax.f32 %v523, 0.0
    %v730 = vmax.f32 %v526, 0.0
    %v731 = vmax.f32 %v531, 0.0
    %v732 = vmax.f32 %v534, 0.0
    %v733 = vmax.f32 %v539, 0.0
    %v734 = vmax.f32 %v542, 0.0
    %v735 = vmax.f32 %v547, 0.0
    %v736 = vmax.f32 %v550, 0.0
    %v737 = vmax.f32 %v555, 0.0
    %v738 = vmax.f32 %v558, 0.0
    %v739 = vmax.f32 %v563, 0.0
    %v740 = vmax.f32 %v566, 0.0
    %v741 = vmax.f32 %v571, 0.0
    %v742 = vmax.f32 %v574, 0.0
    %v743 = vmax.f32 %v579, 0.0
    %v744 = vmax.f32 %v582, 0.0
    %v745 = vmax.f32 %v587, 0.0
    %v746 = vmax.f32 %v590, 0.0
    %v747 = vmax.f32 %v595, 0.0
    %v748 = vmax.f32 %v598, 0.0
    %v749 = vmax.f32 %v603, 0.0
    %v750 = vmax.f32 %v606, 0.0
    %v751 = vmax.f32 %v611, 0.0
    %v752 = vmax.f32 %v614, 0.0
    %v753 = vmax.f32 %v619, 0.0
    %v754 = vmax.f32 %v622, 0.0
    %v755 = vmax.f32 %v627, 0.0
    %v756 = vmax.f32 %v630, 0.0
    %v757 = vmax.f32 %v635, 0.0
    %v758 = vmax.f32 %v638, 0.0
    %v759 = vmax.f32 %v643, 0.0
    %v760 = vmax.f32 %v646, 0.0
    %v761 = vmax.f32 %v651, 0.0
    %v762 = vmax.f32 %v654, 0.0
    %v763 = vmax.f32 %v659, 0.0
    %v764 = vmax.f32 %v662, 0.0
    %v765 = vmax.f32 %v667, 0.0
    %v766 = vmax.f32 %v670, 0.0
    %v767 = vmax.f32 %v675, 0.0
    %v768 = vmax.f32 %v678, 0.0
    %v769 = vmax.f32 %v683, 0.0
    %v770 = vmax.f32 %v686, 0.0
    %v771 = vmax.f32 %v691, 0.0
    %v772 = vmax.f32 %v694, 0.0
    %v773 = vmax.f32 %v699, 0.0
    %v774 = vmax.f32 %v702, 0.0
    %v775 = vmax.f32 %v707, 0.0
    %v776 = vmax.f32 %v710, 0.0
    %v777 = vld [vmem:[#allocation5] sm:$0xff]
    %v778 = vld [vmem:[#allocation5 + $0x8] sm:$0xff]
    %v779 = vld [vmem:[#allocation5 + $0x10] sm:$0xff]
    %v780 = vld [vmem:[#allocation5 + $0x18] sm:$0xff]
    %781 = vmatprep.subr.mxu0 0.0
    %782 = vmatpush1.msra.mxu0 %v713
    %783 = vmatprep.subr.mxu0 0.0
    %784 = vmatpush1.msra.mxu0 %v714
    %785 = vmatprep.subr.mxu0 0.0
    %786 = vmatpush1.msra.mxu0 %v715
    %787 = vmatprep.subr.mxu0 0.0
    %788 = vmatpush1.msra.mxu0 %v716
    %789 = vmatprep.subr.mxu0 0.0
    %790 = vmatpush1.msra.mxu0 %v717
    %791 = vmatprep.subr.mxu0 0.0
    %792 = vmatpush1.msra.mxu0 %v718
    %793 = vmatprep.subr.mxu0 0.0
    %794 = vmatpush1.msra.mxu0 %v719
    %795 = vmatprep.subr.mxu0 0.0
    %796 = vmatpush1.msra.mxu0 %v720
    %797 = vmatprep.subr.mxu0 0.0
    %798 = vmatpush1.msra.mxu0 %v721
    %799 = vmatprep.subr.mxu0 0.0
    %800 = vmatpush1.msra.mxu0 %v722
    %801 = vmatprep.subr.mxu0 0.0
    %802 = vmatpush1.msra.mxu0 %v723
    %803 = vmatprep.subr.mxu0 0.0
    %804 = vmatpush1.msra.mxu0 %v724
    %805 = vmatprep.subr.mxu0 0.0
    %806 = vmatpush1.msra.mxu0 %v725
    %807 = vmatprep.subr.mxu0 0.0
    %808 = vmatpush1.msra.mxu0 %v726
    %809 = vmatprep.subr.mxu0 0.0
    %810 = vmatpush1.msra.mxu0 %v727
    %811 = vmatprep.subr.mxu0 0.0
    %812 = vmatpush1.msra.mxu0 %v728
    %813 = vmatprep.subr.mxu0 0.0
    %814 = vmatpush1.msra.mxu0 %v729
    %815 = vmatprep.subr.mxu0 0.0
    %816 = vmatpush1.msra.mxu0 %v730
    %817 = vmatprep.subr.mxu0 0.0
    %818 = vmatpush1.msra.mxu0 %v731
    %819 = vmatprep.subr.mxu0 0.0
    %820 = vmatpush1.msra.mxu0 %v732
    %821 = vmatprep.subr.mxu0 0.0
    %822 = vmatpush1.msra.mxu0 %v733
    %823 = vmatprep.subr.mxu0 0.0
    %824 = vmatpush1.msra.mxu0 %v734
    %825 = vmatprep.subr.mxu0 0.0
    %826 = vmatpush1.msra.mxu0 %v735
    %827 = vmatprep.subr.mxu0 0.0
    %828 = vmatpush1.msra.mxu0 %v736
    %829 = vmatprep.subr.mxu0 0.0
    %830 = vmatpush1.msra.mxu0 %v737
    %831 = vmatprep.subr.mxu0 0.0
    %832 = vmatpush1.msra.mxu0 %v738
    %833 = vmatprep.subr.mxu0 0.0
    %834 = vmatpush1.msra.mxu0 %v739
    %835 = vmatprep.subr.mxu0 0.0
    %836 = vmatpush1.msra.mxu0 %v740
    %837 = vmatprep.subr.mxu0 0.0
    %838 = vmatpush1.msra.mxu0 %v741
    %839 = vmatprep.subr.mxu0 0.0
    %840 = vmatpush1.msra.mxu0 %v742
    %841 = vmatprep.subr.mxu0 0.0
    %842 = vmatpush1.msra.mxu0 %v743
    %843 = vmatprep.subr.mxu0 0.0
    %844 = vmatpush1.msra.mxu0 %v744
    %845 = vmatprep.mubr.f32.mxu0 %v778
    %846 = vmatmul.mubr.f32.gmra.mrb[0].mxu0 %v777
    %v847 = vpop.f32.mrb[0].mxu0
    %v848 = vadd.f32 0.0, %v847
    %v849 = vpop.f32.mrb[0].mxu0
    %850 = vdwg.mxu0
    %851 = vmatprep.subr.mxu0 0.0
    %852 = vmatpush1.msra.mxu0 %v745
    %853 = vmatprep.subr.mxu0 0.0
    %854 = vmatpush1.msra.mxu0 %v746
    %855 = vmatprep.subr.mxu0 0.0
    %856 = vmatpush1.msra.mxu0 %v747
    %857 = vmatprep.subr.mxu0 0.0
    %858 = vmatpush1.msra.mxu0 %v748
    %859 = vmatprep.subr.mxu0 0.0
    %860 = vmatpush1.msra.mxu0 %v749
    %861 = vmatprep.subr.mxu0 0.0
    %862 = vmatpush1.msra.mxu0 %v750
    %863 = vmatprep.subr.mxu0 0.0
    %864 = vmatpush1.msra.mxu0 %v751
    %865 = vmatprep.subr.mxu0 0.0
    %866 = vmatpush1.msra.mxu0 %v752
    %867 = vmatprep.subr.mxu0 0.0
    %868 = vmatpush1.msra.mxu0 %v753
    %869 = vmatprep.subr.mxu0 0.0
    %870 = vmatpush1.msra.mxu0 %v754
    %871 = vmatprep.subr.mxu0 0.0
    %872 = vmatpush1.msra.mxu0 %v755
    %873 = vmatprep.subr.mxu0 0.0
    %874 = vmatpush1.msra.mxu0 %v756
    %875 = vmatprep.subr.mxu0 0.0
    %876 = vmatpush1.msra.mxu0 %v757
    %877 = vmatprep.subr.mxu0 0.0
    %878 = vmatpush1.msra.mxu0 %v758
    %879 = vmatprep.subr.mxu0 0.0
    %880 = vmatpush1.msra.mxu0 %v759
    %881 = vmatprep.subr.mxu0 0.0
    %882 = vmatpush1.msra.mxu0 %v760
    %883 = vmatprep.subr.mxu0 0.0
    %884 = vmatpush1.msra.mxu0 %v761
    %885 = vmatprep.subr.mxu0 0.0
    %886 = vmatpush1.msra.mxu0 %v762
    %887 = vmatprep.subr.mxu0 0.0
    %888 = vmatpush1.msra.mxu0 %v763
    %889 = vmatprep.subr.mxu0 0.0
    %890 = vmatpush1.msra.mxu0 %v764
    %891 = vmatprep.subr.mxu0 0.0
    %892 = vmatpush1.msra.mxu0 %v765
    %893 = vmatprep.subr.mxu0 0.0
    %894 = vmatpush1.msra.mxu0 %v766
    %895 = vmatprep.subr.mxu0 0.0
    %896 = vmatpush1.msra.mxu0 %v767
    %897 = vmatprep.subr.mxu0 0.0
    %898 = vmatpush1.msra.mxu0 %v768
    %899 = vmatprep.subr.mxu0 0.0
    %900 = vmatpush1.msra.mxu0 %v769
    %901 = vmatprep.subr.mxu0 0.0
    %902 = vmatpush1.msra.mxu0 %v770
    %903 = vmatprep.subr.mxu0 0.0
    %904 = vmatpush1.msra.mxu0 %v771
    %905 = vmatprep.subr.mxu0 0.0
    %906 = vmatpush1.msra.mxu0 %v772
    %907 = vmatprep.subr.mxu0 0.0
    %908 = vmatpush1.msra.mxu0 %v773
    %909 = vmatprep.subr.mxu0 0.0
    %910 = vmatpush1.msra.mxu0 %v774
    %911 = vmatprep.subr.mxu0 0.0
    %912 = vmatpush1.msra.mxu0 %v775
    %913 = vmatprep.subr.mxu0 0.0
    %914 = vmatpush1.msra.mxu0 %v776
    %915 = vmatprep.mubr.f32.mxu0 %v780
    %916 = vmatmul.mubr.f32.gmra.mrb[0].mxu0 %v779
    %v917 = vpop.f32.mrb[0].mxu0
    %v918 = vadd.f32 %v848, %v917
    %v919 = vpop.f32.mrb[0].mxu0
    %920 = vdwg.mxu0
    %v921 = vpack.c.bf16 %v918, %v918
    %v922 = vld [vmem:[#allocation8] sm:$0xf]
    %v923 = vld [vmem:[#allocation8 + $0x4] sm:$0xf]
    %v924 = vld [vmem:[#allocation8 + $0x8] sm:$0xf]
    %v925 = vld [vmem:[#allocation8 + $0xc] sm:$0xf]
    %v926 = vld [vmem:[#allocation8 + $0x10] sm:$0xf]
    %v927 = vld [vmem:[#allocation8 + $0x14] sm:$0xf]
    %v928 = vld [vmem:[#allocation8 + $0x18] sm:$0xf]
    %v929 = vld [vmem:[#allocation8 + $0x1c] sm:$0xf]
    %v930 = vld [vmem:[#allocation8 + $0x20] sm:$0xf]
    %v931 = vld [vmem:[#allocation8 + $0x24] sm:$0xf]
    %v932 = vld [vmem:[#allocation8 + $0x28] sm:$0xf]
    %v933 = vld [vmem:[#allocation8 + $0x2c] sm:$0xf]
    %v934 = vld [vmem:[#allocation8 + $0x30] sm:$0xf]
    %v935 = vld [vmem:[#allocation8 + $0x34] sm:$0xf]
    %v936 = vld [vmem:[#allocation8 + $0x38] sm:$0xf]
    %v937 = vld [vmem:[#allocation8 + $0x3c] sm:$0xf]
    %v938 = vld [vmem:[%s5] sm:$0x1]
    %v940 = vlaneseq
    %v941 = vshrl.u32 %v940, 7
    %v942 = vsub.s32 0, %v941
    %v943 = vrot.slane %v938, %v942
    %v961 = vunpack.c.l.b16 %v922
    %v962 = vunpack.c.l.b16 %v923
    %v963 = vunpack.c.l.b16 %v924
    %v964 = vunpack.c.l.b16 %v925
    %v965 = vunpack.c.l.b16 %v926
    %v966 = vunpack.c.l.b16 %v927
    %v967 = vunpack.c.l.b16 %v928
    %v968 = vunpack.c.l.b16 %v929
    %v969 = vunpack.c.l.b16 %v930
    %v970 = vunpack.c.l.b16 %v931
    %v971 = vunpack.c.l.b16 %v932
    %v972 = vunpack.c.l.b16 %v933
    %v973 = vunpack.c.l.b16 %v934
    %v974 = vunpack.c.l.b16 %v935
    %v975 = vunpack.c.l.b16 %v936
    %v976 = vunpack.c.l.b16 %v937
    %v977 = vpack.c.b16 %v962, %v961
    %v978 = vpack.c.b16 %v964, %v963
    %v979 = vpack.c.b16 %v966, %v965
    %v980 = vpack.c.b16 %v968, %v967
    %v981 = vpack.c.b16 %v970, %v969
    %v982 = vpack.c.b16 %v972, %v971
    %v983 = vpack.c.b16 %v974, %v973
    %v984 = vpack.c.b16 %v976, %v975
    %993 = vmatprep.subr.bf16.mxu0 0
    %994 = vmatpush1.bf16.msra.mxu0 %v977
    %995 = vmatprep.subr.bf16.mxu0 0
    %996 = vmatpush1.bf16.msra.mxu0 %v978
    %997 = vmatprep.subr.bf16.mxu0 0
    %998 = vmatpush1.bf16.msra.mxu0 %v979
    %999 = vmatprep.subr.bf16.mxu0 0
    %1000 = vmatpush1.bf16.msra.mxu0 %v980
    %1001 = vmatprep.subr.bf16.mxu0 0
    %1002 = vmatpush1.bf16.msra.mxu0 %v981
    %1003 = vmatprep.subr.bf16.mxu0 0
    %1004 = vmatpush1.bf16.msra.mxu0 %v982
    %1005 = vmatprep.subr.bf16.mxu0 0
    %1006 = vmatpush1.bf16.msra.mxu0 %v983
    %1007 = vmatprep.subr.bf16.mxu0 0
    %1008 = vmatpush1.bf16.msra.mxu0 %v984
    %1009 = vmatprep.subr.bf16.mxu0 0
    %1010 = vmatpush1.bf16.msra.mxu0 0
    %1011 = vmatprep.subr.bf16.mxu0 0
    %1012 = vmatpush1.bf16.msra.mxu0 0
    %1013 = vmatprep.subr.bf16.mxu0 0
    %1014 = vmatpush1.bf16.msra.mxu0 0
    %1015 = vmatprep.subr.bf16.mxu0 0
    %1016 = vmatpush1.bf16.msra.mxu0 0
    %1017 = vmatprep.subr.bf16.mxu0 0
    %1018 = vmatpush1.bf16.msra.mxu0 0
    %1019 = vmatprep.subr.bf16.mxu0 0
    %1020 = vmatpush1.bf16.msra.mxu0 0
    %1021 = vmatprep.subr.bf16.mxu0 0
    %1022 = vmatpush1.bf16.msra.mxu0 0
    %1023 = vmatprep.subr.bf16.mxu0 0
    %1024 = vmatpush1.bf16.msra.mxu0 0
    %1025 = vmatprep.mubr.bf16.mxu0 0
    %1026 = vmatmul.mubr.bf16.gmra.mrb[0].mxu0 %v921
    %v1027 = vpop.f32.mrb[0].mxu0
    %v1028 = vadd.f32 %v943, %v1027
    %v1029 = vpop.f32.mrb[0].mxu0
    %v1030 = vpop.f32.mrb[0].mxu0
    %v1031 = vpop.f32.mrb[0].mxu0
    %1032 = vdwg.mxu0
    %v1033 = vpack.c.bf16 %v1028, %v1028
    %v1034 = vld [vmem:[#allocation10] sm:$0xf]
    %v1035 = vld [vmem:[#allocation10 + $0x4] sm:$0xf]
    %v1036 = vld [vmem:[#allocation10 + $0x8] sm:$0xf]
    %v1037 = vld [vmem:[#allocation10 + $0xc] sm:$0xf]
    %v1038 = vld [vmem:[#allocation10 + $0x10] sm:$0xf]
    %v1039 = vld [vmem:[#allocation10 + $0x14] sm:$0xf]
    %v1040 = vld [vmem:[#allocation10 + $0x18] sm:$0xf]
    %v1041 = vld [vmem:[#allocation10 + $0x1c] sm:$0xf]
    %v1042 = vld [vmem:[#allocation10 + $0x20] sm:$0xf]
    %v1043 = vld [vmem:[#allocation10 + $0x24] sm:$0xf]
    %v1044 = vld [vmem:[#allocation10 + $0x28] sm:$0xf]
    %v1045 = vld [vmem:[#allocation10 + $0x2c] sm:$0xf]
    %v1046 = vld [vmem:[#allocation10 + $0x30] sm:$0xf]
    %v1047 = vld [vmem:[#allocation10 + $0x34] sm:$0xf]
    %v1048 = vld [vmem:[#allocation10 + $0x38] sm:$0xf]
    %v1049 = vld [vmem:[#allocation10 + $0x3c] sm:$0xf]
    %v1050 = vld [vmem:[%s7] sm:$0x1]
    %v1052 = vlaneseq
    %v1053 = vshrl.u32 %v1052, 7
    %v1054 = vsub.s32 0, %v1053
    %v1055 = vrot.slane %v1050, %v1054
    %v1073 = vunpack.c.l.b16 %v1034
    %v1074 = vunpack.c.l.b16 %v1035
    %v1075 = vunpack.c.l.b16 %v1036
    %v1076 = vunpack.c.l.b16 %v1037
    %v1077 = vunpack.c.l.b16 %v1038
    %v1078 = vunpack.c.l.b16 %v1039
    %v1079 = vunpack.c.l.b16 %v1040
    %v1080 = vunpack.c.l.b16 %v1041
    %v1081 = vunpack.c.l.b16 %v1042
    %v1082 = vunpack.c.l.b16 %v1043
    %v1083 = vunpack.c.l.b16 %v1044
    %v1084 = vunpack.c.l.b16 %v1045
    %v1085 = vunpack.c.l.b16 %v1046
    %v1086 = vunpack.c.l.b16 %v1047
    %v1087 = vunpack.c.l.b16 %v1048
    %v1088 = vunpack.c.l.b16 %v1049
    %v1089 = vpack.c.b16 %v1074, %v1073
    %v1090 = vpack.c.b16 %v1076, %v1075
    %v1091 = vpack.c.b16 %v1078, %v1077
    %v1092 = vpack.c.b16 %v1080, %v1079
    %v1093 = vpack.c.b16 %v1082, %v1081
    %v1094 = vpack.c.b16 %v1084, %v1083
    %v1095 = vpack.c.b16 %v1086, %v1085
    %v1096 = vpack.c.b16 %v1088, %v1087
    %1105 = vmatprep.subr.bf16.mxu0 0
    %1106 = vmatpush1.bf16.msra.mxu0 %v1089
    %1107 = vmatprep.subr.bf16.mxu0 0
    %1108 = vmatpush1.bf16.msra.mxu0 %v1090
    %1109 = vmatprep.subr.bf16.mxu0 0
    %1110 = vmatpush1.bf16.msra.mxu0 %v1091
    %1111 = vmatprep.subr.bf16.mxu0 0
    %1112 = vmatpush1.bf16.msra.mxu0 %v1092
    %1113 = vmatprep.subr.bf16.mxu0 0
    %1114 = vmatpush1.bf16.msra.mxu0 %v1093
    %1115 = vmatprep.subr.bf16.mxu0 0
    %1116 = vmatpush1.bf16.msra.mxu0 %v1094
    %1117 = vmatprep.subr.bf16.mxu0 0
    %1118 = vmatpush1.bf16.msra.mxu0 %v1095
    %1119 = vmatprep.subr.bf16.mxu0 0
    %1120 = vmatpush1.bf16.msra.mxu0 %v1096
    %1121 = vmatprep.subr.bf16.mxu0 0
    %1122 = vmatpush1.bf16.msra.mxu0 0
    %1123 = vmatprep.subr.bf16.mxu0 0
    %1124 = vmatpush1.bf16.msra.mxu0 0
    %1125 = vmatprep.subr.bf16.mxu0 0
    %1126 = vmatpush1.bf16.msra.mxu0 0
    %1127 = vmatprep.subr.bf16.mxu0 0
    %1128 = vmatpush1.bf16.msra.mxu0 0
    %1129 = vmatprep.subr.bf16.mxu0 0
    %1130 = vmatpush1.bf16.msra.mxu0 0
    %1131 = vmatprep.subr.bf16.mxu0 0
    %1132 = vmatpush1.bf16.msra.mxu0 0
    %1133 = vmatprep.subr.bf16.mxu0 0
    %1134 = vmatpush1.bf16.msra.mxu0 0
    %1135 = vmatprep.subr.bf16.mxu0 0
    %1136 = vmatpush1.bf16.msra.mxu0 0
    %1137 = vmatprep.mubr.bf16.mxu0 0
    %1138 = vmatmul.mubr.bf16.gmra.mrb[0].mxu0 %v1033
    %v1139 = vpop.f32.mrb[0].mxu0
    %v1140 = vadd.f32 %v1055, %v1139
    %v1141 = vpop.f32.mrb[0].mxu0
    %v1142 = vpop.f32.mrb[0].mxu0
    %v1143 = vpop.f32.mrb[0].mxu0
    %1144 = vdwg.mxu0
    %v1145 = vlaneseq
    %v1146 = vand.u32 %v1145, 127
    %vm1147 = vcmp.ge.s32.totalorder %v1146, 0
    %vm1148 = vcmp.lt.s32.totalorder %v1146, 3
    %vm1149 = vmand %vm1147, %vm1148
    %v1150 = vsel %vm1149, %v1140, -1e+30
    %1151 = vmax.xlane.f32.xlu0 %v1150
    %v1152 = vpop.xlane.xlu0 %1151
    %v1153 = vsub.f32 %v1150, %v1152
    %v1154 = vmul.f32 %v1153, 1.442695
    %v1155 = vpow.pop %v1154
    %v1156 = vsel %vm1149, %v1155, 0.0
    %1157 = vadd.xlane.f32.xlu0 %v1156
    %v1158 = vpop.xlane.xlu0 %1157
    %v1159 = vrcp.pop %v1158
    %v1160 = vmul.f32 %v1156, %v1159
    %v1161 = vadd.f32 %v1160, 0.0
    %vm1162 = vcmp.ge.s32.totalorder %v1146, 3
    %vm1163 = vcmp.lt.s32.totalorder %v1146, 8
    %vm1164 = vmand %vm1162, %vm1163
    %v1165 = vsel %vm1164, %v1140, -1e+30
    %1166 = vmax.xlane.f32.xlu0 %v1165
    %v1167 = vpop.xlane.xlu0 %1166
    %v1168 = vsub.f32 %v1165, %v1167
    %v1169 = vmul.f32 %v1168, 1.442695
    %v1170 = vpow.pop %v1169
    %v1171 = vsel %vm1164, %v1170, 0.0
    %1172 = vadd.xlane.f32.xlu0 %v1171
    %v1173 = vpop.xlane.xlu0 %1172
    %v1174 = vrcp.pop %v1173
    %v1175 = vmul.f32 %v1171, %v1174
    %v1176 = vadd.f32 %v1161, %v1175
    %vm1177 = vcmp.ge.s32.totalorder %v1146, 8
    %vm1178 = vcmp.lt.s32.totalorder %v1146, 15
    %vm1179 = vmand %vm1177, %vm1178
    %v1180 = vsel %vm1179, %v1140, -1e+30
    %1181 = vmax.xlane.f32.xlu0 %v1180
    %v1182 = vpop.xlane.xlu0 %1181
    %v1183 = vsub.f32 %v1180, %v1182
    %v1184 = vmul.f32 %v1183, 1.442695
    %v1185 = vpow.pop %v1184
    %v1186 = vsel %vm1179, %v1185, 0.0
    %1187 = vadd.xlane.f32.xlu0 %v1186
    %v1188 = vpop.xlane.xlu0 %1187
    %v1189 = vrcp.pop %v1188
    %v1190 = vmul.f32 %v1186, %v1189
    %v1191 = vadd.f32 %v1176, %v1190
    %1192 = vst [vmem:[#allocation11] sm:$0xff] %v1191
    // Predicated region
    $region54: #{tpu_custom_call.1} parent=1 // pred_check
      _
    $region55: #{tpu_custom_call.1} parent=1 // pred_check_branch
      %1194 = sbr.rel (0) target = $region57
    $region56: #{tpu_custom_call.1} parent=1 // pred_region
      %s1196 = ssub.s32 128, 128
      %1197 = vsyncadd [#allocation4], %s1196
      %s1199 = sshll.u32 [#allocation11], 4
      %s1200 = int_to_ptr.vmem [resolvable:$true] %s1199
      %1202 = dma.vmem_to_hbm [thread:$0]  %s1200, 128, %s8, [#allocation4]
    $region57: #{tpu_custom_call.1} parent=1 // pred_fallthru
      _
    // Predicated region
    $region58: #{tpu_custom_call.1} parent=1 // pred_check
      _
    $region59: #{tpu_custom_call.1} parent=1 // pred_check_branch
      %1204 = sbr.rel (0) target = $region61
    $region60: #{tpu_custom_call.1} parent=1 // pred_region
      %1205 = dma.done [#allocation4], 128
    $region61: #{tpu_custom_call.1} parent=1 // pred_fallthru
      _
    %1206 = vsyncpa [#allocation3], 1
    %1207 = vsyncpa [#allocation6], 1
    %1208 = vsyncpa [#allocation9], 1
    %1209 = vsyncpa [#allocation4], 1

</llo_original>
